<compile_context>
chip_gen: v7x
topology: tpu7x:2x2x1
jax: 0.10.0
libtpu: 0.0.40
codegen_flags: <defaults>
</compile_context>

<pallas_src>
import jax
import jax.numpy as jnp
from jax import lax
from jax.experimental import pallas as pl
from jax.experimental.pallas import tpu as pltpu


def conv1x1_tanh_kernel(x_ref, w_ref, b_ref, o_ref):
    # x_ref: (Cin, M)  -- native NCHW(N=1) view, no pre-transpose
    # w_ref: (Cout, Cin) -- native Conv2d weight view, no pre-transpose
    # b_ref: (1, Cout)
    # o_ref: (M, Cout)  -- lane-dense (Cout = 256 on the lane dim)
    acc = lax.dot_general(
        x_ref[...],
        w_ref[...],
        dimension_numbers=(((0,), (1,)), ((), ())),  # x^T @ w^T on the MXU
        preferred_element_type=jnp.float32,
    )
    o_ref[...] = jnp.tanh(acc + b_ref[...])


def conv1x1_tanh(x_nchw, weight, bias):
    """x_nchw: (N, Cin, H, W) f32; weight: (Cout, Cin, 1, 1) f32; bias: (Cout,) f32."""
    n, cin, h, w = x_nchw.shape
    cout = weight.shape[0]
    m = n * h * w

    if n == 1:
        # NCHW with N=1 is already (Cin, H*W) contiguous: pure reshape, no copy.
        x_cm = x_nchw.reshape(cin, m)
    else:
        # Fold the batch into M so it is still one pallas_call (amortizes the
        # fixed per-call overhead and the weight DMA). Needs one transpose.
        x_cm = jnp.transpose(x_nchw, (1, 0, 2, 3)).reshape(cin, m)

    w_oc = weight.reshape(cout, cin)  # contiguous view of the conv weight
    b_mat = bias.reshape(1, cout)

    out_mat = pl.pallas_call(
        conv1x1_tanh_kernel,
        out_shape=jax.ShapeDtypeStruct((m, cout), jnp.float32),
        in_specs=[
            pl.BlockSpec(memory_space=pltpu.MemorySpace.VMEM),
            pl.BlockSpec(memory_space=pltpu.MemorySpace.VMEM),
            pl.BlockSpec(memory_space=pltpu.MemorySpace.VMEM),
        ],
        out_specs=pl.BlockSpec(memory_space=pltpu.MemorySpace.VMEM),
        compiler_params=pltpu.CompilerParams(vmem_limit_bytes=8 * 1024 * 1024),
    )(x_cm, w_oc, b_mat)

    # Rows of out_mat are ordered (N, H, W); cheap 50 KB reshuffle back to NCHW.
    return jnp.transpose(out_mat.reshape(n, h, w, cout), (0, 3, 1, 2))


if __name__ == "__main__":
    key = jax.random.PRNGKey(0)
    kx, kw, kb = jax.random.split(key, 3)

    N, CIN, H, W, COUT = 1, 224, 7, 7, 256

    x = jax.random.normal(kx, (N, CIN, H, W), dtype=jnp.float32)

    # Deterministic synthetic params (PyTorch-like uniform init scale).
    fan_in = CIN * 1 * 1
    bound = 1.0 / (fan_in ** 0.5)
    weight = jax.random.uniform(kw, (COUT, CIN, 1, 1), jnp.float32, -bound, bound)
    bias = jax.random.uniform(kb, (COUT,), jnp.float32, -bound, bound)

    out = conv1x1_tanh(x, weight, bias)
    out = jax.block_until_ready(out)

    # Correctness check against a plain-JAX reference.
    ref = jnp.tanh(
        jnp.einsum("nchw,oc->nohw", x, weight.reshape(COUT, CIN))
        + bias.reshape(1, COUT, 1, 1)
    )
    assert out.shape == (N, COUT, H, W)
    assert jnp.allclose(out, ref, atol=1e-5, rtol=1e-5)

    print("KERNEL_OK")
</pallas_src>

<mosaic_0001>
module attributes {stable_mosaic.version = 11 : i64} {
  func.func @conv1x1_tanh_kernel(%arg0: memref<224x49xf32, #tpu.memory_space<vmem>>, %arg1: memref<256x224xf32, #tpu.memory_space<vmem>>, %arg2: memref<1x256xf32, #tpu.memory_space<vmem>>, %arg3: memref<49x256xf32, #tpu.memory_space<vmem>>) attributes {dimension_semantics = [], scalar_prefetch = 0 : i64, scratch_operands = 0 : i64, tpu.core_type = #tpu.core_type<tc>} {
    %c0 = arith.constant 0 : index
    %c0_0 = arith.constant 0 : index
    %0 = vector.load %arg0[%c0, %c0_0] : memref<224x49xf32, #tpu.memory_space<vmem>>, vector<224x49xf32>
    %c0_1 = arith.constant 0 : index
    %c0_2 = arith.constant 0 : index
    %1 = vector.load %arg1[%c0_1, %c0_2] : memref<256x224xf32, #tpu.memory_space<vmem>>, vector<256x224xf32>
    %cst = arith.constant dense<0.000000e+00> : vector<49x256xf32>
    %2 = tpu.matmul %0, %1, %cst {dimension_numbers = #tpu.dot_dimension_numbers<[0], [1], [1], [0], [0, 1, 1, 0], [], []>} : vector<224x49xf32>, vector<256x224xf32>, vector<49x256xf32> -> vector<49x256xf32>
    %c0_3 = arith.constant 0 : index
    %c0_4 = arith.constant 0 : index
    %3 = vector.load %arg2[%c0_3, %c0_4] : memref<1x256xf32, #tpu.memory_space<vmem>>, vector<1x256xf32>
    %4 = vector.broadcast %3 : vector<1x256xf32> to vector<49x256xf32>
    %5 = arith.addf %2, %4 : vector<49x256xf32>
    %6 = math.tanh %5 : vector<49x256xf32>
    %c0_5 = arith.constant 0 : index
    %c0_6 = arith.constant 0 : index
    %7 = vector.load %arg3[%c0_5, %c0_6] : memref<49x256xf32, #tpu.memory_space<vmem>>, vector<49x256xf32>
    tpu.vector_store %arg3[%c0_5, %c0_6], %6 {strides = array<i32>} : memref<49x256xf32, #tpu.memory_space<vmem>>, vector<49x256xf32>,
    return
  }
}

</mosaic_0001>

<llo_original>
// kernel: tpu_custom_call.1
$region0: #{tpu_custom_call.1}
  #allocation0 [shape = 'u32[]', space=smem, size = 0x4, offset = 0x4, fixed_abs, tag = 'smem constant byte address 0x4 - core index']
  #allocation1 [shape = 'u32[144,128]{1,0:T(1,128)}', space=vmem, size = 0x12000, scoped, tag = 'internal scratch']
  %s0 = inlined_call_operand.vmem [shape: f32[224,49], index: 0, kind: input, shape index: {}]
  %s1 = inlined_call_operand.vmem [shape: f32[256,224], index: 1, kind: input, shape index: {}]
  %s2 = inlined_call_operand.vmem [shape: f32[1,256], index: 2, kind: input, shape index: {}]
  %s3 = inlined_call_operand.hbm [shape: f32[49,256], index: 3, kind: output, shape index: {}]
  %s4 = sld [smem:[#allocation0]]
  $region22: #{tpu_custom_call.1} parent=0
    _
  %s6 = ssub.s32 1, %s4
  %s7 = scalar_select 0, %s6, %s4
  $region1: #{tpu_custom_call.1} parent=0
    #allocation2 [shape = 'u8[57344]{0}', space=vmem, size = 0xe000, scoped, tag = 'output window, operand 0, single buffered']
    #allocation3 [shape = 's32[1]{0}', space=sflag, size = 0x4, scoped, tag = 'scoped memory for tpu_custom_call.1']
    %8 = vsyncpa [#allocation3], 0
    // Predicated region
    $region2: #{tpu_custom_call.1} parent=1 // pred_check
      _
    $region3: #{tpu_custom_call.1} parent=1 // pred_check_branch
      %10 = sbr.rel (0) target = $region5
    $region4: #{tpu_custom_call.1} parent=1 // pred_region
      _
    $region5: #{tpu_custom_call.1} parent=1 // pred_fallthru
      _
    // Predicated region
    $region6: #{tpu_custom_call.1} parent=1 // pred_check
      _
    $region7: #{tpu_custom_call.1} parent=1 // pred_check_branch
      %12 = sbr.rel (0) target = $region9
    $region8: #{tpu_custom_call.1} parent=1 // pred_region
      _
    $region9: #{tpu_custom_call.1} parent=1 // pred_fallthru
      _
    // Predicated region
    $region10: #{tpu_custom_call.1} parent=1 // pred_check
      _
    $region11: #{tpu_custom_call.1} parent=1 // pred_check_branch
      %14 = sbr.rel (0) target = $region13
    $region12: #{tpu_custom_call.1} parent=1 // pred_region
      _
    $region13: #{tpu_custom_call.1} parent=1 // pred_fallthru
      _
    %v15 = vld [vmem:[%s0] sm:$0xff]
    %v16 = vld [vmem:[%s0 + $0x8] sm:$0xff]
    %v17 = vld [vmem:[%s0 + $0x10] sm:$0xff]
    %v18 = vld [vmem:[%s0 + $0x18] sm:$0xff]
    %v19 = vld [vmem:[%s0 + $0x20] sm:$0xff]
    %v20 = vld [vmem:[%s0 + $0x28] sm:$0xff]
    %v21 = vld [vmem:[%s0 + $0x30] sm:$0xff]
    %v22 = vld [vmem:[%s0 + $0x38] sm:$0xff]
    %v23 = vld [vmem:[%s0 + $0x40] sm:$0xff]
    %v24 = vld [vmem:[%s0 + $0x48] sm:$0xff]
    %v25 = vld [vmem:[%s0 + $0x50] sm:$0xff]
    %v26 = vld [vmem:[%s0 + $0x58] sm:$0xff]
    %v27 = vld [vmem:[%s0 + $0x60] sm:$0xff]
    %v28 = vld [vmem:[%s0 + $0x68] sm:$0xff]
    %v29 = vld [vmem:[%s0 + $0x70] sm:$0xff]
    %v30 = vld [vmem:[%s0 + $0x78] sm:$0xff]
    %v31 = vld [vmem:[%s0 + $0x80] sm:$0xff]
    %v32 = vld [vmem:[%s0 + $0x88] sm:$0xff]
    %v33 = vld [vmem:[%s0 + $0x90] sm:$0xff]
    %v34 = vld [vmem:[%s0 + $0x98] sm:$0xff]
    %v35 = vld [vmem:[%s0 + $0xa0] sm:$0xff]
    %v36 = vld [vmem:[%s0 + $0xa8] sm:$0xff]
    %v37 = vld [vmem:[%s0 + $0xb0] sm:$0xff]
    %v38 = vld [vmem:[%s0 + $0xb8] sm:$0xff]
    %v39 = vld [vmem:[%s0 + $0xc0] sm:$0xff]
    %v40 = vld [vmem:[%s0 + $0xc8] sm:$0xff]
    %v41 = vld [vmem:[%s0 + $0xd0] sm:$0xff]
    %v42 = vld [vmem:[%s0 + $0xd8] sm:$0xff]
    %v43 = vld [vmem:[%s1] sm:$0xff]
    %v44 = vld [vmem:[%s1 + $0x8] sm:$0xff]
    %v45 = vld [vmem:[%s1 + $0x10] sm:$0xff]
    %v46 = vld [vmem:[%s1 + $0x18] sm:$0xff]
    %v47 = vld [vmem:[%s1 + $0x20] sm:$0xff]
    %v48 = vld [vmem:[%s1 + $0x28] sm:$0xff]
    %v49 = vld [vmem:[%s1 + $0x30] sm:$0xff]
    %v50 = vld [vmem:[%s1 + $0x38] sm:$0xff]
    %v51 = vld [vmem:[%s1 + $0x40] sm:$0xff]
    %v52 = vld [vmem:[%s1 + $0x48] sm:$0xff]
    %v53 = vld [vmem:[%s1 + $0x50] sm:$0xff]
    %v54 = vld [vmem:[%s1 + $0x58] sm:$0xff]
    %v55 = vld [vmem:[%s1 + $0x60] sm:$0xff]
    %v56 = vld [vmem:[%s1 + $0x68] sm:$0xff]
    %v57 = vld [vmem:[%s1 + $0x70] sm:$0xff]
    %v58 = vld [vmem:[%s1 + $0x78] sm:$0xff]
    %v59 = vld [vmem:[%s1 + $0x80] sm:$0xff]
    %v60 = vld [vmem:[%s1 + $0x88] sm:$0xff]
    %v61 = vld [vmem:[%s1 + $0x90] sm:$0xff]
    %v62 = vld [vmem:[%s1 + $0x98] sm:$0xff]
    %v63 = vld [vmem:[%s1 + $0xa0] sm:$0xff]
    %v64 = vld [vmem:[%s1 + $0xa8] sm:$0xff]
    %v65 = vld [vmem:[%s1 + $0xb0] sm:$0xff]
    %v66 = vld [vmem:[%s1 + $0xb8] sm:$0xff]
    %v67 = vld [vmem:[%s1 + $0xc0] sm:$0xff]
    %v68 = vld [vmem:[%s1 + $0xc8] sm:$0xff]
    %v69 = vld [vmem:[%s1 + $0xd0] sm:$0xff]
    %v70 = vld [vmem:[%s1 + $0xd8] sm:$0xff]
    %v71 = vld [vmem:[%s1 + $0xe0] sm:$0xff]
    %v72 = vld [vmem:[%s1 + $0xe8] sm:$0xff]
    %v73 = vld [vmem:[%s1 + $0xf0] sm:$0xff]
    %v74 = vld [vmem:[%s1 + $0xf8] sm:$0xff]
    %v75 = vld [vmem:[%s1 + $0x100] sm:$0xff]
    %v76 = vld [vmem:[%s1 + $0x108] sm:$0xff]
    %v77 = vld [vmem:[%s1 + $0x110] sm:$0xff]
    %v78 = vld [vmem:[%s1 + $0x118] sm:$0xff]
    %v79 = vld [vmem:[%s1 + $0x120] sm:$0xff]
    %v80 = vld [vmem:[%s1 + $0x128] sm:$0xff]
    %v81 = vld [vmem:[%s1 + $0x130] sm:$0xff]
    %v82 = vld [vmem:[%s1 + $0x138] sm:$0xff]
    %v83 = vld [vmem:[%s1 + $0x140] sm:$0xff]
    %v84 = vld [vmem:[%s1 + $0x148] sm:$0xff]
    %v85 = vld [vmem:[%s1 + $0x150] sm:$0xff]
    %v86 = vld [vmem:[%s1 + $0x158] sm:$0xff]
    %v87 = vld [vmem:[%s1 + $0x160] sm:$0xff]
    %v88 = vld [vmem:[%s1 + $0x168] sm:$0xff]
    %v89 = vld [vmem:[%s1 + $0x170] sm:$0xff]
    %v90 = vld [vmem:[%s1 + $0x178] sm:$0xff]
    %v91 = vld [vmem:[%s1 + $0x180] sm:$0xff]
    %v92 = vld [vmem:[%s1 + $0x188] sm:$0xff]
    %v93 = vld [vmem:[%s1 + $0x190] sm:$0xff]
    %v94 = vld [vmem:[%s1 + $0x198] sm:$0xff]
    %v95 = vld [vmem:[%s1 + $0x1a0] sm:$0xff]
    %v96 = vld [vmem:[%s1 + $0x1a8] sm:$0xff]
    %v97 = vld [vmem:[%s1 + $0x1b0] sm:$0xff]
    %v98 = vld [vmem:[%s1 + $0x1b8] sm:$0xff]
    %v99 = vld [vmem:[%s1 + $0x1c0] sm:$0xff]
    %v100 = vld [vmem:[%s1 + $0x1c8] sm:$0xff]
    %v101 = vld [vmem:[%s1 + $0x1d0] sm:$0xff]
    %v102 = vld [vmem:[%s1 + $0x1d8] sm:$0xff]
    %v103 = vld [vmem:[%s1 + $0x1e0] sm:$0xff]
    %v104 = vld [vmem:[%s1 + $0x1e8] sm:$0xff]
    %v105 = vld [vmem:[%s1 + $0x1f0] sm:$0xff]
    %v106 = vld [vmem:[%s1 + $0x1f8] sm:$0xff]
    %v107 = vld [vmem:[%s2] sm:$0x3]
    %v109 = vlaneseq
    %v110 = vshrl.u32 %v109, 7
    %v111 = vsub.s32 0, %v110
    %v112 = vrot.slane %v107, %v111
    %v113 = vlaneseq
    %v114 = vshrl.u32 %v113, 7
    %v115 = vsub.s32 1, %v114
    %v116 = vrot.slane %v107, %v115
    %119 = vxpose.xlu0.b32.start [1/16] %v15, 128
    %120 = vxpose.xlu0.b32.cont [2/16] %v16, 128
    %121 = vxpose.xlu0.b32.cont [3/16] %v17, 128
    %122 = vxpose.xlu0.b32.cont [4/16] %v18, 128
    %123 = vxpose.xlu0.b32.cont [5/16] %v19, 128
    %124 = vxpose.xlu0.b32.cont [6/16] %v20, 128
    %125 = vxpose.xlu0.b32.cont [7/16] %v21, 128
    %126 = vxpose.xlu0.b32.cont [8/16] %v22, 128
    %127 = vxpose.xlu0.b32.cont [9/16] %v23, 128
    %128 = vxpose.xlu0.b32.cont [10/16] %v24, 128
    %129 = vxpose.xlu0.b32.cont [11/16] %v25, 128
    %130 = vxpose.xlu0.b32.cont [12/16] %v26, 128
    %131 = vxpose.xlu0.b32.cont [13/16] %v27, 128
    %132 = vxpose.xlu0.b32.cont [14/16] %v28, 128
    %133 = vxpose.xlu0.b32.cont [15/16] %v29, 128
    %134 = vxpose.xlu0.b32.end [16/16] %v30, 128
    %v135 = vpop.trf.xlu0
    %v136 = vpop.trf.xlu0
    %v137 = vpop.trf.xlu0
    %v138 = vpop.trf.xlu0
    %v139 = vpop.trf.xlu0
    %v140 = vpop.trf.xlu0
    %v141 = vpop.trf.xlu0
    %v142 = vpop.trf.xlu0
    %v143 = vpop.trf.xlu0
    %v144 = vpop.trf.xlu0
    %v145 = vpop.trf.xlu0
    %v146 = vpop.trf.xlu0
    %v147 = vpop.trf.xlu0
    %v148 = vpop.trf.xlu0
    %v149 = vpop.trf.xlu0
    %v150 = vpop.trf.xlu0
    %151 = vxpose.xlu0.b32.start [1/16] %v31, 128
    %152 = vxpose.xlu0.b32.cont [2/16] %v32, 128
    %153 = vxpose.xlu0.b32.cont [3/16] %v33, 128
    %154 = vxpose.xlu0.b32.cont [4/16] %v34, 128
    %155 = vxpose.xlu0.b32.cont [5/16] %v35, 128
    %156 = vxpose.xlu0.b32.cont [6/16] %v36, 128
    %157 = vxpose.xlu0.b32.cont [7/16] %v37, 128
    %158 = vxpose.xlu0.b32.cont [8/16] %v38, 128
    %159 = vxpose.xlu0.b32.cont [9/16] %v39, 128
    %160 = vxpose.xlu0.b32.cont [10/16] %v40, 128
    %161 = vxpose.xlu0.b32.cont [11/16] %v41, 128
    %162 = vxpose.xlu0.b32.cont [12/16] %v42, 128
    %163 = vxpose.xlu0.b32.cont [13/16] 0.0, 128
    %164 = vxpose.xlu0.b32.cont [14/16] 0.0, 128
    %165 = vxpose.xlu0.b32.cont [15/16] 0.0, 128
    %166 = vxpose.xlu0.b32.end [16/16] 0.0, 128
    %v167 = vpop.trf.xlu0
    %v168 = vpop.trf.xlu0
    %v169 = vpop.trf.xlu0
    %v170 = vpop.trf.xlu0
    %v171 = vpop.trf.xlu0
    %v172 = vpop.trf.xlu0
    %v173 = vpop.trf.xlu0
    %v174 = vpop.trf.xlu0
    %v175 = vpop.trf.xlu0
    %v176 = vpop.trf.xlu0
    %v177 = vpop.trf.xlu0
    %v178 = vpop.trf.xlu0
    %v179 = vpop.trf.xlu0
    %v180 = vpop.trf.xlu0
    %v181 = vpop.trf.xlu0
    %v182 = vpop.trf.xlu0
    %vm183 = vcmask 785408
    %v185 = vsel %vm183, %v167, 0
    %v188 = vsel %vm183, %v168, 0
    %v191 = vsel %vm183, %v169, 0
    %v194 = vsel %vm183, %v170, 0
    %v197 = vsel %vm183, %v171, 0
    %v200 = vsel %vm183, %v172, 0
    %v203 = vsel %vm183, %v173, 0
    %v206 = vsel %vm183, %v44, 0
    %v209 = vsel %vm183, %v46, 0
    %v212 = vsel %vm183, %v48, 0
    %v215 = vsel %vm183, %v50, 0
    %v218 = vsel %vm183, %v52, 0
    %v221 = vsel %vm183, %v54, 0
    %v224 = vsel %vm183, %v56, 0
    %v227 = vsel %vm183, %v58, 0
    %v230 = vsel %vm183, %v60, 0
    %v233 = vsel %vm183, %v62, 0
    %v236 = vsel %vm183, %v64, 0
    %v239 = vsel %vm183, %v66, 0
    %v242 = vsel %vm183, %v68, 0
    %v245 = vsel %vm183, %v70, 0
    %v248 = vsel %vm183, %v72, 0
    %v251 = vsel %vm183, %v74, 0
    %v254 = vsel %vm183, %v76, 0
    %v257 = vsel %vm183, %v78, 0
    %v260 = vsel %vm183, %v80, 0
    %v263 = vsel %vm183, %v82, 0
    %v266 = vsel %vm183, %v84, 0
    %v269 = vsel %vm183, %v86, 0
    %v272 = vsel %vm183, %v88, 0
    %v275 = vsel %vm183, %v90, 0
    %v278 = vsel %vm183, %v92, 0
    %v281 = vsel %vm183, %v94, 0
    %v284 = vsel %vm183, %v96, 0
    %v287 = vsel %vm183, %v98, 0
    %v290 = vsel %vm183, %v100, 0
    %v293 = vsel %vm183, %v102, 0
    %v296 = vsel %vm183, %v104, 0
    %v299 = vsel %vm183, %v106, 0
    %301 = vmatprep.subr.mxu0 %v206
    %302 = vmatpush1.xpose.msra.mxu0 %v43
    %303 = vmatprep.subr.mxu0 %v209
    %304 = vmatpush1.xpose.msra.mxu0 %v45
    %305 = vmatprep.subr.mxu0 %v212
    %306 = vmatpush1.xpose.msra.mxu0 %v47
    %307 = vmatprep.subr.mxu0 %v215
    %308 = vmatpush1.xpose.msra.mxu0 %v49
    %309 = vmatprep.subr.mxu0 %v218
    %310 = vmatpush1.xpose.msra.mxu0 %v51
    %311 = vmatprep.subr.mxu0 %v221
    %312 = vmatpush1.xpose.msra.mxu0 %v53
    %313 = vmatprep.subr.mxu0 %v224
    %314 = vmatpush1.xpose.msra.mxu0 %v55
    %315 = vmatprep.subr.mxu0 %v227
    %316 = vmatpush1.xpose.msra.mxu0 %v57
    %317 = vmatprep.subr.mxu0 %v230
    %318 = vmatpush1.xpose.msra.mxu0 %v59
    %319 = vmatprep.subr.mxu0 %v233
    %320 = vmatpush1.xpose.msra.mxu0 %v61
    %321 = vmatprep.subr.mxu0 %v236
    %322 = vmatpush1.xpose.msra.mxu0 %v63
    %323 = vmatprep.subr.mxu0 %v239
    %324 = vmatpush1.xpose.msra.mxu0 %v65
    %325 = vmatprep.subr.mxu0 %v242
    %326 = vmatpush1.xpose.msra.mxu0 %v67
    %327 = vmatprep.subr.mxu0 %v245
    %328 = vmatpush1.xpose.msra.mxu0 %v69
    %329 = vmatprep.subr.mxu0 %v248
    %330 = vmatpush1.xpose.msra.mxu0 %v71
    %331 = vmatprep.subr.mxu0 %v251
    %332 = vmatpush1.xpose.msra.mxu0 %v73
    %333 = vmatprep.subr.mxu0 %v254
    %334 = vmatpush1.xpose.msra.mxu0 %v75
    %335 = vmatprep.subr.mxu0 %v257
    %336 = vmatpush1.xpose.msra.mxu0 %v77
    %337 = vmatprep.subr.mxu0 %v260
    %338 = vmatpush1.xpose.msra.mxu0 %v79
    %339 = vmatprep.subr.mxu0 %v263
    %340 = vmatpush1.xpose.msra.mxu0 %v81
    %341 = vmatprep.subr.mxu0 %v266
    %342 = vmatpush1.xpose.msra.mxu0 %v83
    %343 = vmatprep.subr.mxu0 %v269
    %344 = vmatpush1.xpose.msra.mxu0 %v85
    %345 = vmatprep.subr.mxu0 %v272
    %346 = vmatpush1.xpose.msra.mxu0 %v87
    %347 = vmatprep.subr.mxu0 %v275
    %348 = vmatpush1.xpose.msra.mxu0 %v89
    %349 = vmatprep.subr.mxu0 %v278
    %350 = vmatpush1.xpose.msra.mxu0 %v91
    %351 = vmatprep.subr.mxu0 %v281
    %352 = vmatpush1.xpose.msra.mxu0 %v93
    %353 = vmatprep.subr.mxu0 %v284
    %354 = vmatpush1.xpose.msra.mxu0 %v95
    %355 = vmatprep.subr.mxu0 %v287
    %356 = vmatpush1.xpose.msra.mxu0 %v97
    %357 = vmatprep.subr.mxu0 %v290
    %358 = vmatpush1.xpose.msra.mxu0 %v99
    %359 = vmatprep.subr.mxu0 %v293
    %360 = vmatpush1.xpose.msra.mxu0 %v101
    %361 = vmatprep.subr.mxu0 %v296
    %362 = vmatpush1.xpose.msra.mxu0 %v103
    %363 = vmatprep.subr.mxu0 %v299
    %364 = vmatpush1.xpose.msra.mxu0 %v105
    %365 = vmatprep.mubr.f32.mxu0 %v185
    %366 = vmatmul.mubr.f32.gmra.mrb[0].mxu0 %v135
    %v367 = vpop.f32.mrb[0].mxu0
    %v368 = vadd.f32 %v112, %v367
    %v369 = vpop.f32.mrb[0].mxu0
    %v370 = vadd.f32 %v116, %v369
    %371 = vmatprep.mubr.f32.mxu0 %v188
    %372 = vmatmul.mubr.f32.gmra.mrb[0].mxu0 %v136
    %v373 = vpop.f32.mrb[0].mxu0
    %v374 = vadd.f32 %v112, %v373
    %v375 = vpop.f32.mrb[0].mxu0
    %v376 = vadd.f32 %v116, %v375
    %377 = vmatprep.mubr.f32.mxu0 %v191
    %378 = vmatmul.mubr.f32.gmra.mrb[0].mxu0 %v137
    %v379 = vpop.f32.mrb[0].mxu0
    %v380 = vadd.f32 %v112, %v379
    %v381 = vpop.f32.mrb[0].mxu0
    %v382 = vadd.f32 %v116, %v381
    %383 = vmatprep.mubr.f32.mxu0 %v194
    %384 = vmatmul.mubr.f32.gmra.mrb[0].mxu0 %v138
    %v385 = vpop.f32.mrb[0].mxu0
    %v386 = vadd.f32 %v112, %v385
    %v387 = vpop.f32.mrb[0].mxu0
    %v388 = vadd.f32 %v116, %v387
    %389 = vmatprep.mubr.f32.mxu0 %v197
    %390 = vmatmul.mubr.f32.gmra.mrb[0].mxu0 %v139
    %v391 = vpop.f32.mrb[0].mxu0
    %v392 = vadd.f32 %v112, %v391
    %v393 = vpop.f32.mrb[0].mxu0
    %v394 = vadd.f32 %v116, %v393
    %395 = vmatprep.mubr.f32.mxu0 %v200
    %396 = vmatmul.mubr.f32.gmra.mrb[0].mxu0 %v140
    %v397 = vpop.f32.mrb[0].mxu0
    %v398 = vadd.f32 %v112, %v397
    %v399 = vpop.f32.mrb[0].mxu0
    %v400 = vadd.f32 %v116, %v399
    %401 = vmatprep.mubr.f32.mxu0 %v203
    %402 = vmatmul.mubr.f32.gmra.mrb[0].mxu0 %v141
    %v403 = vpop.f32.mrb[0].mxu0
    %v404 = vadd.f32 %v112, %v403
    %v405 = vpop.f32.mrb[0].mxu0
    %v406 = vadd.f32 %v116, %v405
    %407 = vdwg.mxu0
    %v408 = vtanh.pop %v368
    %v409 = vtanh.pop %v370
    %v410 = vtanh.pop %v374
    %v411 = vtanh.pop %v376
    %v412 = vtanh.pop %v380
    %v413 = vtanh.pop %v382
    %v414 = vtanh.pop %v386
    %v415 = vtanh.pop %v388
    %v416 = vtanh.pop %v392
    %v417 = vtanh.pop %v394
    %v418 = vtanh.pop %v398
    %v419 = vtanh.pop %v400
    %v420 = vtanh.pop %v404
    %v421 = vtanh.pop %v406
    %422 = vst [vmem:[#allocation2] sm:$0xff] %v408
    %423 = vst [vmem:[#allocation2 + $0x8] sm:$0xff] %v409
    %424 = vst [vmem:[#allocation2 + $0x10] sm:$0xff] %v410
    %425 = vst [vmem:[#allocation2 + $0x18] sm:$0xff] %v411
    %426 = vst [vmem:[#allocation2 + $0x20] sm:$0xff] %v412
    %427 = vst [vmem:[#allocation2 + $0x28] sm:$0xff] %v413
    %428 = vst [vmem:[#allocation2 + $0x30] sm:$0xff] %v414
    %429 = vst [vmem:[#allocation2 + $0x38] sm:$0xff] %v415
    %430 = vst [vmem:[#allocation2 + $0x40] sm:$0xff] %v416
    %431 = vst [vmem:[#allocation2 + $0x48] sm:$0xff] %v417
    %432 = vst [vmem:[#allocation2 + $0x50] sm:$0xff] %v418
    %433 = vst [vmem:[#allocation2 + $0x58] sm:$0xff] %v419
    %434 = vst [vmem:[#allocation2 + $0x60] sm:$0x1] %v420
    %435 = vst [vmem:[#allocation2 + $0x68] sm:$0x1] %v421
    // Predicated region
    $region14: #{tpu_custom_call.1} parent=1 // pred_check
      _
    $region15: #{tpu_custom_call.1} parent=1 // pred_check_branch
      %437 = sbr.rel (0) target = $region17
    $region16: #{tpu_custom_call.1} parent=1 // pred_region
      %s439 = ssub.s32 1792, 1792
      %440 = vsyncadd [#allocation3], %s439
      %s441 = sshll.u32 [#allocation2], 4
      %s442 = int_to_ptr.vmem [resolvable:$true] %s441
      %447 = dma.vmem_to_hbm [thread:$0]  %s442, 1792, %s3, [#allocation3], 256, 256, 16
    $region17: #{tpu_custom_call.1} parent=1 // pred_fallthru
      _
    // Predicated region
    $region18: #{tpu_custom_call.1} parent=1 // pred_check
      _
    $region19: #{tpu_custom_call.1} parent=1 // pred_check_branch
      %449 = sbr.rel (0) target = $region21
    $region20: #{tpu_custom_call.1} parent=1 // pred_region
      %450 = dma.done [#allocation3], 1792
    $region21: #{tpu_custom_call.1} parent=1 // pred_fallthru
      _
    %451 = vsyncpa [#allocation3], 1

</llo_original>
